<compile_context>
chip_gen: v7x
topology: tpu7x:2x2x1
jax: 0.10.0
libtpu: 0.0.40
codegen_flags: <defaults>
</compile_context>

<pallas_src>
import jax
import jax.numpy as jnp
from jax.experimental import pallas as pl
from jax.experimental.pallas import tpu as pltpu

# ----------------------------- config (cfg.model.comosvc defaults) ------------
P_MEAN = -1.2
P_STD = 1.2
SIGMA_DATA = 0.5
SIGMA_MIN = 0.002
SIGMA_MAX = 80.0
RHO = 7.0

# ----------------------------- small synthetic shapes -------------------------
B = 2        # batch
N_MEL = 32   # n_mel
L = 16       # frames
HID = 128    # hidden width of surrogate denoiser


def _pick_frame_tile(n_frames):
    """Lane (frame) tile: full L for small inputs, else the largest 128-multiple
    divisor up to 2048 (double-buffered VMEM stays << 32 MiB on every generation)."""
    if n_frames <= 2048:
        return n_frames
    for tl in (2048, 1024, 512, 256, 128):
        if n_frames % tl == 0:
            return tl
    # TODO(synk): ragged frame counts > 2048 not divisible by 128 fall back to a single
    # (large) block; pad/mask handling would be needed for production.
    return n_frames


def edm_loss_kernel(coef_ref,                                   # SMEM [B, 8] per-batch scalars
                    x_ref, cond_ref, z_ref, fmask_ref,          # VMEM [M, TL] / [1, TL]
                    w1t_ref, wct_ref, b1t_ref, tvt_ref, w2t_ref, b2t_ref,
                    num_ref):                                   # VMEM [1, TL] per-frame partials
    b = pl.program_id(0)
    sigma = coef_ref[b, 0]
    c_in = coef_ref[b, 1]
    c_skip = coef_ref[b, 2]
    c_out = coef_ref[b, 3]
    c_noise = coef_ref[b, 4]
    weight = coef_ref[b, 5]

    x = x_ref[...]                    # [M, TL] f32
    cond = cond_ref[...]              # [M, TL] f32
    fmask = fmask_ref[...]            # [1, TL] f32 (per-frame mask)

    # ---- EDMLoss: noisy sample y = x + (z + cond) * sigma -------------------
    y = x + (z_ref[...] + cond) * sigma

    # ---- EDMPrecond input scaling; bf16 MXU operands, f32 accumulation ------
    x_in = (c_in * y).astype(jnp.bfloat16)
    cond_bf = cond.astype(jnp.bfloat16)

    # ---- surrogate denoiser F(x_in, c_noise, cond) in transposed [., L] layout
    # (two dots summed in registers — no concat scratch round trip, no transposes)
    h = (jnp.dot(w1t_ref[...], x_in, preferred_element_type=jnp.float32) +
         jnp.dot(wct_ref[...], cond_bf, preferred_element_type=jnp.float32))   # [H, TL]
    h = jnp.tanh(h + c_noise * tvt_ref[...] + b1t_ref[...])                    # f32 epilogue
    f_x = jnp.dot(w2t_ref[...], h.astype(jnp.bfloat16),
                  preferred_element_type=jnp.float32) + b2t_ref[...]           # [M, TL]

    # ---- D_x and masked, weighted squared error, reduced over mel -----------
    d_x = c_skip * y + c_out * f_x
    diff = d_x - x
    num_ref[...] = jnp.sum((weight * fmask) * (diff * diff), axis=0, keepdims=True)


@jax.jit
def consistency_forward(x_bml, nonpadding_bml, cond_bml, params, rnd_normal, z_std):
    """Teacher-mode training forward: returns the scalar EDM loss.

    x_bml, nonpadding_bml, cond_bml: [B, n_mel, L]  (PyTorch layout)
    rnd_normal: [B]    z_std: [B, n_mel, L]  (standard-normal draws, glue)
    """
    w1, wc, b1, tvec, w2, b2 = params
    bsz, n_mel, n_frames = x_bml.shape
    hid = w1.shape[1]

    # ---- per-batch EDM coefficients -> [B, 8] f32 table (SMEM via scalar prefetch)
    sd = SIGMA_DATA
    sigma = jnp.exp(rnd_normal.astype(jnp.float32) * P_STD + P_MEAN)            # [B]
    sig2 = sigma * sigma
    zero = jnp.zeros_like(sigma)
    coef = jnp.stack([
        sigma,
        1.0 / jnp.sqrt(sd * sd + sig2),                       # c_in
        (sd * sd) / (sig2 + sd * sd),                         # c_skip
        (sigma - SIGMA_MIN) * sd / jnp.sqrt(sig2 + sd * sd),  # c_out
        jnp.log(sigma) * 0.25,                                # c_noise
        (sig2 + sd * sd) / ((sigma * sd) ** 2),               # weight
        zero, zero,                                           # pad to 8
    ], axis=1)                                                # [B, 8] f32

    # ---- per-frame mask (CoMoSVC nonpadding is a frame mask broadcast over mel) ----
    fmask = nonpadding_bml[:, :1, :].astype(jnp.float32)      # [B, 1, L]

    # ---- transposed denoiser weights (activations stay in [mel, L] layout) ---------
    w1t = jnp.transpose(w1).astype(jnp.bfloat16)              # [H, M]
    wct = jnp.transpose(wc).astype(jnp.bfloat16)              # [H, M]
    b1t = jnp.transpose(b1).astype(jnp.float32)               # [H, 1]
    tvt = jnp.transpose(tvec).astype(jnp.float32)             # [H, 1]
    w2t = jnp.transpose(w2).astype(jnp.bfloat16)              # [M, H]
    b2t = jnp.transpose(b2).astype(jnp.float32)               # [M, 1]

    x_f = x_bml.astype(jnp.float32)
    cond_f = cond_bml.astype(jnp.float32)
    z_f = z_std.astype(jnp.float32)

    tl = _pick_frame_tile(n_frames)
    n_lt = n_frames // tl

    act_spec = pl.BlockSpec((None, n_mel, tl), lambda bi, li, *_: (bi, 0, li))
    frm_spec = pl.BlockSpec((None, 1, tl), lambda bi, li, *_: (bi, 0, li))

    def resident(shape):                       # weights: constant block, stays in VMEM
        return pl.BlockSpec(shape, lambda bi, li, *_: (0,) * len(shape))

    per_frame_num = pl.pallas_call(
        edm_loss_kernel,
        out_shape=jax.ShapeDtypeStruct((bsz, 1, n_frames), jnp.float32),
        grid_spec=pltpu.PrefetchScalarGridSpec(
            num_scalar_prefetch=1,
            grid=(bsz, n_lt),
            in_specs=[act_spec, act_spec, act_spec, frm_spec,
                      resident(w1t.shape), resident(wct.shape),
                      resident(b1t.shape), resident(tvt.shape),
                      resident(w2t.shape), resident(b2t.shape)],
            out_specs=frm_spec),
        compiler_params=pltpu.CompilerParams(
            # per-step outputs are disjoint blocks -> both axes safely "parallel"
            # (engages both v7x TensorCores; no shared-scalar accumulator race).
            dimension_semantics=("parallel", "parallel"),
            vmem_limit_bytes=32 * 1024 * 1024),
    )(coef, x_f, cond_f, z_f, fmask, w1t, wct, b1t, tvt, w2t, b2t)

    den = jnp.float32(n_mel) * jnp.sum(fmask)          # == sum(nonpadding) for frame masks
    return jnp.sum(per_frame_num) / den


def reference_forward(x_bml, nonpadding_bml, cond_bml, params, rnd_normal, z_std):
    """Plain-jnp mirror of the PyTorch EDMLoss with the same surrogate denoiser (same
    bf16 MXU-operand casts, so kernel vs. reference differ only by fp reduction order)."""
    w1, wc, b1, tvec, w2, b2 = params
    sd = SIGMA_DATA
    sigma = jnp.exp(rnd_normal * P_STD + P_MEAN).reshape(-1, 1, 1)        # [B,1,1]
    weight = (sigma ** 2 + sd ** 2) / (sigma * sd) ** 2
    noise = (z_std + cond_bml) * sigma
    y = x_bml + noise                                                     # [B, M, L]

    c_skip = sd ** 2 / (sigma ** 2 + sd ** 2)
    c_out = (sigma - SIGMA_MIN) * sd / jnp.sqrt(sigma ** 2 + sd ** 2)
    c_in = 1.0 / jnp.sqrt(sd ** 2 + sigma ** 2)
    c_noise = jnp.log(sigma) / 4.0

    x_in = jnp.transpose(c_in * y, (0, 2, 1))                             # [B, L, M]
    cond_t = jnp.transpose(cond_bml, (0, 2, 1))
    xc = jnp.concatenate([x_in, cond_t], axis=-1).astype(jnp.bfloat16)    # [B, L, 2M]
    wf = jnp.concatenate([w1, wc], axis=0).astype(jnp.bfloat16)           # [2M, H]
    h = jnp.dot(xc, wf, preferred_element_type=jnp.float32)
    h = jnp.tanh(h + c_noise * tvec[None] + b1[None])
    f_x = jnp.dot(h.astype(jnp.bfloat16), w2.astype(jnp.bfloat16),
                  preferred_element_type=jnp.float32) + b2[None]          # [B, L, M]
    f_x = jnp.transpose(f_x, (0, 2, 1))                                   # [B, M, L]

    d_x = c_skip * y + c_out * f_x
    loss = weight * (d_x - x_bml) ** 2
    return jnp.sum(loss * nonpadding_bml) / jnp.sum(nonpadding_bml)


if __name__ == "__main__":
    key = jax.random.PRNGKey(0)
    (k_x, k_c, k_rn, k_z, k_w1, k_wc, k_b1, k_t, k_w2, k_b2) = jax.random.split(key, 10)

    # inputs in PyTorch layout [B, n_mel, L]
    x = jax.random.normal(k_x, (B, N_MEL, L), jnp.float32)
    cond = jax.random.normal(k_c, (B, N_MEL, L), jnp.float32) * 0.5
    # nonpadding mask: last 3 frames of batch 1 padded (frame mask broadcast over mel)
    mask = jnp.ones((B, N_MEL, L), jnp.float32).at[1, :, -3:].set(0.0)

    # random draws done in glue (deterministic)
    rnd_normal = jax.random.normal(k_rn, (B,), jnp.float32)
    z_std = jax.random.normal(k_z, (B, N_MEL, L), jnp.float32)

    # deterministic surrogate-denoiser parameters
    w1 = jax.random.normal(k_w1, (N_MEL, HID), jnp.float32) * 0.1
    wc = jax.random.normal(k_wc, (N_MEL, HID), jnp.float32) * 0.1
    b1 = jax.random.normal(k_b1, (1, HID), jnp.float32) * 0.01
    tvec = jax.random.normal(k_t, (1, HID), jnp.float32) * 0.1
    w2 = jax.random.normal(k_w2, (HID, N_MEL), jnp.float32) * 0.1
    b2 = jax.random.normal(k_b2, (1, N_MEL), jnp.float32) * 0.01
    params = (w1, wc, b1, tvec, w2, b2)

    loss = consistency_forward(x, mask, cond, params, rnd_normal, z_std)
    loss = jax.block_until_ready(loss)

    ref = reference_forward(x, mask, cond, params, rnd_normal, z_std)
    assert jnp.allclose(loss, ref, rtol=2e-3, atol=2e-4), (loss, ref)

    print("KERNEL_OK")
</pallas_src>

<mosaic_0001>
module attributes {stable_mosaic.version = 11 : i64} {
  func.func @edm_loss_kernel(%arg0: i32, %arg1: i32, %arg2: memref<2x8xf32, #tpu.memory_space<smem>>, %arg3: memref<1x32x16xf32, #tpu.memory_space<vmem>>, %arg4: memref<1x32x16xf32, #tpu.memory_space<vmem>>, %arg5: memref<1x32x16xf32, #tpu.memory_space<vmem>>, %arg6: memref<1x1x16xf32, #tpu.memory_space<vmem>>, %arg7: memref<128x32xbf16, #tpu.memory_space<vmem>>, %arg8: memref<128x32xbf16, #tpu.memory_space<vmem>>, %arg9: memref<128x1xf32, #tpu.memory_space<vmem>>, %arg10: memref<128x1xf32, #tpu.memory_space<vmem>>, %arg11: memref<32x128xbf16, #tpu.memory_space<vmem>>, %arg12: memref<32x1xf32, #tpu.memory_space<vmem>>, %arg13: memref<1x1x16xf32, #tpu.memory_space<vmem>>) attributes {dimension_semantics = [#tpu.dimension_semantics<parallel>, #tpu.dimension_semantics<parallel>], iteration_bounds = array<i64: 2, 1>, scalar_prefetch = 1 : i64, scratch_operands = 0 : i64, tpu.core_type = #tpu.core_type<tc>, window_params = [{transform_indices = @transform_0, window_bounds = array<i64: 1, 32, 16>}, {transform_indices = @transform_1, window_bounds = array<i64: 1, 32, 16>}, {transform_indices = @transform_2, window_bounds = array<i64: 1, 32, 16>}, {transform_indices = @transform_3, window_bounds = array<i64: 1, 1, 16>}, {pipeline_mode = #tpu.pipeline_mode<synchronous>, transform_indices = @transform_4, window_bounds = array<i64: 128, 32>}, {pipeline_mode = #tpu.pipeline_mode<synchronous>, transform_indices = @transform_5, window_bounds = array<i64: 128, 32>}, {pipeline_mode = #tpu.pipeline_mode<synchronous>, transform_indices = @transform_6, window_bounds = array<i64: 128, 1>}, {pipeline_mode = #tpu.pipeline_mode<synchronous>, transform_indices = @transform_7, window_bounds = array<i64: 128, 1>}, {pipeline_mode = #tpu.pipeline_mode<synchronous>, transform_indices = @transform_8, window_bounds = array<i64: 32, 128>}, {pipeline_mode = #tpu.pipeline_mode<synchronous>, transform_indices = @transform_9, window_bounds = array<i64: 32, 1>}, {transform_indices = @transform_10, window_bounds = array<i64: 1, 1, 16>}]} {
    %0 = arith.index_cast %arg0 : i32 to index
    %c0 = arith.constant 0 : index
    %1 = memref.load %arg2[%0, %c0] : memref<2x8xf32, #tpu.memory_space<smem>>
    %2 = arith.index_cast %arg0 : i32 to index
    %c1 = arith.constant 1 : index
    %3 = memref.load %arg2[%2, %c1] : memref<2x8xf32, #tpu.memory_space<smem>>
    %4 = arith.index_cast %arg0 : i32 to index
    %c2 = arith.constant 2 : index
    %5 = memref.load %arg2[%4, %c2] : memref<2x8xf32, #tpu.memory_space<smem>>
    %6 = arith.index_cast %arg0 : i32 to index
    %c3 = arith.constant 3 : index
    %7 = memref.load %arg2[%6, %c3] : memref<2x8xf32, #tpu.memory_space<smem>>
    %8 = arith.index_cast %arg0 : i32 to index
    %c4 = arith.constant 4 : index
    %9 = memref.load %arg2[%8, %c4] : memref<2x8xf32, #tpu.memory_space<smem>>
    %10 = arith.index_cast %arg0 : i32 to index
    %c5 = arith.constant 5 : index
    %11 = memref.load %arg2[%10, %c5] : memref<2x8xf32, #tpu.memory_space<smem>>
    %c0_0 = arith.constant 0 : index
    %c0_1 = arith.constant 0 : index
    %c0_2 = arith.constant 0 : index
    %12 = vector.load %arg3[%c0_0, %c0_1, %c0_2] : memref<1x32x16xf32, #tpu.memory_space<vmem>>, vector<1x32x16xf32>
    %13 = vector.shape_cast %12 : vector<1x32x16xf32> to vector<32x16xf32>
    %c0_3 = arith.constant 0 : index
    %c0_4 = arith.constant 0 : index
    %c0_5 = arith.constant 0 : index
    %14 = vector.load %arg4[%c0_3, %c0_4, %c0_5] : memref<1x32x16xf32, #tpu.memory_space<vmem>>, vector<1x32x16xf32>
    %15 = vector.shape_cast %14 : vector<1x32x16xf32> to vector<32x16xf32>
    %c0_6 = arith.constant 0 : index
    %c0_7 = arith.constant 0 : index
    %c0_8 = arith.constant 0 : index
    %16 = vector.load %arg6[%c0_6, %c0_7, %c0_8] : memref<1x1x16xf32, #tpu.memory_space<vmem>>, vector<1x1x16xf32>
    %17 = vector.shape_cast %16 : vector<1x1x16xf32> to vector<1x16xf32>
    %c0_9 = arith.constant 0 : index
    %c0_10 = arith.constant 0 : index
    %c0_11 = arith.constant 0 : index
    %18 = vector.load %arg5[%c0_9, %c0_10, %c0_11] : memref<1x32x16xf32, #tpu.memory_space<vmem>>, vector<1x32x16xf32>
    %19 = vector.shape_cast %18 : vector<1x32x16xf32> to vector<32x16xf32>
    %20 = arith.addf %19, %15 : vector<32x16xf32>
    %21 = vector.broadcast %1 : f32 to vector<32x16xf32>
    %22 = arith.mulf %20, %21 : vector<32x16xf32>
    %23 = arith.addf %13, %22 : vector<32x16xf32>
    %24 = vector.broadcast %3 : f32 to vector<32x16xf32>
    %25 = arith.mulf %24, %23 : vector<32x16xf32>
    %26 = arith.truncf %25 : vector<32x16xf32> to vector<32x16xbf16>
    %27 = arith.truncf %15 : vector<32x16xf32> to vector<32x16xbf16>
    %c0_12 = arith.constant 0 : index
    %c0_13 = arith.constant 0 : index
    %28 = vector.load %arg7[%c0_12, %c0_13] : memref<128x32xbf16, #tpu.memory_space<vmem>>, vector<128x32xbf16>
    %cst = arith.constant dense<0.000000e+00> : vector<128x16xf32>
    %29 = tpu.matmul %28, %26, %cst {dimension_numbers = #tpu.dot_dimension_numbers<[1], [0], [0], [1], [0, 0, 1, 1], [], []>} : vector<128x32xbf16>, vector<32x16xbf16>, vector<128x16xf32> -> vector<128x16xf32>
    %c0_14 = arith.constant 0 : index
    %c0_15 = arith.constant 0 : index
    %30 = vector.load %arg8[%c0_14, %c0_15] : memref<128x32xbf16, #tpu.memory_space<vmem>>, vector<128x32xbf16>
    %cst_16 = arith.constant dense<0.000000e+00> : vector<128x16xf32>
    %31 = tpu.matmul %30, %27, %cst_16 {dimension_numbers = #tpu.dot_dimension_numbers<[1], [0], [0], [1], [0, 0, 1, 1], [], []>} : vector<128x32xbf16>, vector<32x16xbf16>, vector<128x16xf32> -> vector<128x16xf32>
    %32 = arith.addf %29, %31 : vector<128x16xf32>
    %c0_17 = arith.constant 0 : index
    %c0_18 = arith.constant 0 : index
    %33 = vector.load %arg10[%c0_17, %c0_18] : memref<128x1xf32, #tpu.memory_space<vmem>>, vector<128x1xf32>
    %34 = vector.broadcast %9 : f32 to vector<128x1xf32>
    %35 = arith.mulf %34, %33 : vector<128x1xf32>
    %36 = vector.broadcast %35 : vector<128x1xf32> to vector<128x16xf32>
    %37 = arith.addf %32, %36 : vector<128x16xf32>
    %c0_19 = arith.constant 0 : index
    %c0_20 = arith.constant 0 : index
    %38 = vector.load %arg9[%c0_19, %c0_20] : memref<128x1xf32, #tpu.memory_space<vmem>>, vector<128x1xf32>
    %39 = vector.broadcast %38 : vector<128x1xf32> to vector<128x16xf32>
    %40 = arith.addf %37, %39 : vector<128x16xf32>
    %41 = math.tanh %40 : vector<128x16xf32>
    %c0_21 = arith.constant 0 : index
    %c0_22 = arith.constant 0 : index
    %42 = vector.load %arg11[%c0_21, %c0_22] : memref<32x128xbf16, #tpu.memory_space<vmem>>, vector<32x128xbf16>
    %43 = arith.truncf %41 : vector<128x16xf32> to vector<128x16xbf16>
    %cst_23 = arith.constant dense<0.000000e+00> : vector<32x16xf32>
    %44 = tpu.matmul %42, %43, %cst_23 {dimension_numbers = #tpu.dot_dimension_numbers<[1], [0], [0], [1], [0, 0, 1, 1], [], []>} : vector<32x128xbf16>, vector<128x16xbf16>, vector<32x16xf32> -> vector<32x16xf32>
    %c0_24 = arith.constant 0 : index
    %c0_25 = arith.constant 0 : index
    %45 = vector.load %arg12[%c0_24, %c0_25] : memref<32x1xf32, #tpu.memory_space<vmem>>, vector<32x1xf32>
    %46 = vector.broadcast %45 : vector<32x1xf32> to vector<32x16xf32>
    %47 = arith.addf %44, %46 : vector<32x16xf32>
    %48 = vector.broadcast %5 : f32 to vector<32x16xf32>
    %49 = arith.mulf %48, %23 : vector<32x16xf32>
    %50 = vector.broadcast %7 : f32 to vector<32x16xf32>
    %51 = arith.mulf %50, %47 : vector<32x16xf32>
    %52 = arith.addf %49, %51 : vector<32x16xf32>
    %53 = arith.subf %52, %13 : vector<32x16xf32>
    %54 = vector.broadcast %11 : f32 to vector<1x16xf32>
    %55 = arith.mulf %54, %17 : vector<1x16xf32>
    %56 = arith.mulf %53, %53 : vector<32x16xf32>
    %57 = vector.broadcast %55 : vector<1x16xf32> to vector<32x16xf32>
    %58 = arith.mulf %57, %56 : vector<32x16xf32>
    %cst_26 = arith.constant dense<0.000000e+00> : vector<16xf32>
    %59 = vector.multi_reduction <add>, %58, %cst_26 [0] : vector<32x16xf32> to vector<16xf32>
    %60 = vector.shape_cast %59 : vector<16xf32> to vector<1x16xf32>
    %c0_27 = arith.constant 0 : index
    %c0_28 = arith.constant 0 : index
    %c0_29 = arith.constant 0 : index
    %61 = vector.load %arg13[%c0_27, %c0_28, %c0_29] : memref<1x1x16xf32, #tpu.memory_space<vmem>>, vector<1x1x16xf32>
    %62 = vector.shape_cast %61 : vector<1x1x16xf32> to vector<1x16xf32>
    %63 = vector.shape_cast %60 : vector<1x16xf32> to vector<1x1x16xf32>
    tpu.vector_store %arg13[%c0_27, %c0_28, %c0_29], %63 {strides = array<i32>} : memref<1x1x16xf32, #tpu.memory_space<vmem>>, vector<1x1x16xf32>,
    return
  }
  func.func @transform_0(%arg0: i32, %arg1: i32, %arg2: memref<2x8xf32, #tpu.memory_space<smem>>) -> (i32, i32, i32) {
    %c0_i32 = arith.constant 0 : i32
    %c0_i32_0 = arith.constant 0 : i32
    return %arg0, %c0_i32, %arg1 : i32, i32, i32
  }
  func.func @transform_1(%arg0: i32, %arg1: i32, %arg2: memref<2x8xf32, #tpu.memory_space<smem>>) -> (i32, i32, i32) {
    %c0_i32 = arith.constant 0 : i32
    %c0_i32_0 = arith.constant 0 : i32
    return %arg0, %c0_i32, %arg1 : i32, i32, i32
  }
  func.func @transform_2(%arg0: i32, %arg1: i32, %arg2: memref<2x8xf32, #tpu.memory_space<smem>>) -> (i32, i32, i32) {
    %c0_i32 = arith.constant 0 : i32
    %c0_i32_0 = arith.constant 0 : i32
    return %arg0, %c0_i32, %arg1 : i32, i32, i32
  }
  func.func @transform_3(%arg0: i32, %arg1: i32, %arg2: memref<2x8xf32, #tpu.memory_space<smem>>) -> (i32, i32, i32) {
    %c0_i32 = arith.constant 0 : i32
    %c0_i32_0 = arith.constant 0 : i32
    return %arg0, %c0_i32, %arg1 : i32, i32, i32
  }
  func.func @transform_4(%arg0: i32, %arg1: i32, %arg2: memref<2x8xf32, #tpu.memory_space<smem>>) -> (i32, i32) {
    %c0_i32 = arith.constant 0 : i32
    %c0_i32_0 = arith.constant 0 : i32
    %c0_i32_1 = arith.constant 0 : i32
    return %c0_i32, %c0_i32_0 : i32, i32
  }
  func.func @transform_5(%arg0: i32, %arg1: i32, %arg2: memref<2x8xf32, #tpu.memory_space<smem>>) -> (i32, i32) {
    %c0_i32 = arith.constant 0 : i32
    %c0_i32_0 = arith.constant 0 : i32
    %c0_i32_1 = arith.constant 0 : i32
    return %c0_i32, %c0_i32_0 : i32, i32
  }
  func.func @transform_6(%arg0: i32, %arg1: i32, %arg2: memref<2x8xf32, #tpu.memory_space<smem>>) -> (i32, i32) {
    %c0_i32 = arith.constant 0 : i32
    %c0_i32_0 = arith.constant 0 : i32
    %c0_i32_1 = arith.constant 0 : i32
    return %c0_i32, %c0_i32_0 : i32, i32
  }
  func.func @transform_7(%arg0: i32, %arg1: i32, %arg2: memref<2x8xf32, #tpu.memory_space<smem>>) -> (i32, i32) {
    %c0_i32 = arith.constant 0 : i32
    %c0_i32_0 = arith.constant 0 : i32
    %c0_i32_1 = arith.constant 0 : i32
    return %c0_i32, %c0_i32_0 : i32, i32
  }
  func.func @transform_8(%arg0: i32, %arg1: i32, %arg2: memref<2x8xf32, #tpu.memory_space<smem>>) -> (i32, i32) {
    %c0_i32 = arith.constant 0 : i32
    %c0_i32_0 = arith.constant 0 : i32
    %c0_i32_1 = arith.constant 0 : i32
    return %c0_i32, %c0_i32_0 : i32, i32
  }
  func.func @transform_9(%arg0: i32, %arg1: i32, %arg2: memref<2x8xf32, #tpu.memory_space<smem>>) -> (i32, i32) {
    %c0_i32 = arith.constant 0 : i32
    %c0_i32_0 = arith.constant 0 : i32
    %c0_i32_1 = arith.constant 0 : i32
    return %c0_i32, %c0_i32_0 : i32, i32
  }
  func.func @transform_10(%arg0: i32, %arg1: i32, %arg2: memref<2x8xf32, #tpu.memory_space<smem>>) -> (i32, i32, i32) {
    %c0_i32 = arith.constant 0 : i32
    %c0_i32_0 = arith.constant 0 : i32
    return %arg0, %c0_i32, %arg1 : i32, i32, i32
  }
}

</mosaic_0001>

<llo_original>
// kernel: consistency_forward.1
$region0: #{consistency_forward.1}
  #allocation0 [shape = 'u32[]', space=smem, size = 0x4, offset = 0x4, fixed_abs, tag = 'smem constant byte address 0x4 - core index']
  #allocation1 [shape = 'u32[144,128]{1,0:T(1,128)}', space=vmem, size = 0x12000, scoped, tag = 'internal scratch']
  #allocation2 [shape = 's32[1]{0}', space=sflag, size = 0x4, scoped, tag = 'scoped memory for consistency_forward.1']
  #allocation3 [shape = 'u8[1024]{0}', space=smem, size = 0x400, scoped, tag = 'prefetched SMEM operand 0']
  %s0 = inlined_call_operand.vmem [shape: f32[2,8], index: 0, kind: input, shape index: {}]
  %s1 = inlined_call_operand.vmem [shape: f32[2,32,16], index: 1, kind: input, shape index: {}]
  %s2 = inlined_call_operand.vmem [shape: f32[2,32,16], index: 2, kind: input, shape index: {}]
  %s3 = inlined_call_operand.vmem [shape: f32[2,32,16], index: 3, kind: input, shape index: {}]
  %s4 = inlined_call_operand.vmem [shape: f32[2,1,16], index: 4, kind: input, shape index: {}]
  %s5 = inlined_call_operand.vmem [shape: bf16[128,32], index: 5, kind: input, shape index: {}]
  %s6 = inlined_call_operand.vmem [shape: bf16[128,32], index: 6, kind: input, shape index: {}]
  %s7 = inlined_call_operand.vmem [shape: f32[128,1], index: 7, kind: input, shape index: {}]
  %s8 = inlined_call_operand.vmem [shape: f32[128,1], index: 8, kind: input, shape index: {}]
  %s9 = inlined_call_operand.vmem [shape: bf16[32,128], index: 9, kind: input, shape index: {}]
  %s10 = inlined_call_operand.vmem [shape: f32[32,1], index: 10, kind: input, shape index: {}]
  %s11 = inlined_call_operand.vmem [shape: f32[2,1,16], index: 11, kind: output, shape index: {}]
  %s12 = sld [smem:[#allocation0]]
  $region73: #{consistency_forward.1} parent=0
    _
  %s14 = ssub.s32 1, %s12
  %s15 = scalar_select 0, %s14, %s12
  %s16 = sshll.u32 %s0, 4
  %s17 = int_to_ptr.vmem [resolvable:$true] %s16
  %19 = dma.vmem_to_smem %s17, 32, [#allocation3], [#allocation2]
  %20 = dma.done [#allocation2], 32
  %21 = sfence
  loop: start=0, step=1, limit=4
  $region2: #{consistency_forward.1} parent=0 // loop_pre_header
    _
  $region3: #{consistency_forward.1} parent=0 // loop_header
    %s23 = sphi 0, %s27
    %p24 = scmp.ge.s32.totalorder %s23, 4
    %s30 = sphi 0, %s42
    %s31 = sphi 0, %s38
    %s32 = sphi 0, %s30
    %s33 = sphi 0, %s31
    %s34 = sphi 0, %s32
    %s35 = sphi 0, %s33
    %s47 = sphi 0, %s49
    %s50 = sphi 0, %s47
    %s51 = sphi 0, %s50
    %s67 = sphi 0, %s51
    %s75 = sphi 0, %s77
    %s78 = sphi 0, %s75
    %s79 = sphi 0, %s78
    %s95 = sphi 0, %s79
    %s103 = sphi 0, %s105
    %s106 = sphi 0, %s103
    %s107 = sphi 0, %s106
    %s123 = sphi 0, %s107
    %s131 = sphi 0, %s133
    %s134 = sphi 0, %s131
    %s135 = sphi 0, %s134
    %s151 = sphi 0, %s135
    %s155 = sphi 0, %s155
    %s157 = sphi 0, %s155
    %s158 = sphi 0, %s157
    %s172 = sphi 0, %s158
    %s176 = sphi 0, %s176
    %s178 = sphi 0, %s176
    %s179 = sphi 0, %s178
    %s193 = sphi 0, %s179
    %s197 = sphi 0, %s197
    %s199 = sphi 0, %s197
    %s200 = sphi 0, %s199
    %s214 = sphi 0, %s200
    %s218 = sphi 0, %s218
    %s220 = sphi 0, %s218
    %s221 = sphi 0, %s220
    %s235 = sphi 0, %s221
    %s239 = sphi 0, %s239
    %s241 = sphi 0, %s239
    %s242 = sphi 0, %s241
    %s256 = sphi 0, %s242
    %s260 = sphi 0, %s260
    %s262 = sphi 0, %s260
    %s263 = sphi 0, %s262
    %s277 = sphi 0, %s263
    %s285 = sphi 0, %s287
    %s288 = sphi 0, %s285
    %s289 = sphi 0, %s288
    %s305 = sphi 0, %s289
  $region4: #{consistency_forward.1} parent=0 // loop_header_branch
    %26 = sbr.rel (%p24) target = $region8
  $region5: #{consistency_forward.1} parent=0 // loop_body
    %s28 = ssub.s32 %s23, 1
    %s29 = ssub.s32 %s23, 2
    %s36 = sadd.s32 1, %s31
    %p37 = scmp.ge.s32.totalorder %s36, 1
    %s38 = scalar_select %p37, 0, %s36
    %s39 = sadd.s32 1, %s30
    %s40 = scalar_select %p37, %s39, %s30
    %p41 = scmp.ge.s32.totalorder %s40, 2
    %s42 = scalar_select %p41, 0, %s40
    %s43 = ssub.s32 %s30, %s42
    %s44 = ssub.s32 %s31, %s38
    %s45 = sor.u32 %s43, %s44
    %p46 = scmp.eq.s32.totalorder %s45, 0
    %s48 = sadd.s32 %s47, 1
    %s49 = scalar_select %p46, %s47, %s48
    %p52 = pneg %p46
    %p53 = scmp.eq.s32.totalorder %s23, 1
    %p54 = por %p52, %p53
    %p55 = scmp.ne.s32.totalorder %s47, %s50
    %p56 = scmp.eq.s32.totalorder %s23, 0
    %p57 = por %p55, %p56
    %p58 = scmp.ne.s32.totalorder %s47, %s50
    %p59 = scmp.eq.s32.totalorder %s28, 1
    %p60 = por %p58, %p59
    %p61 = scmp.ne.s32.totalorder %s50, %s51
    %p62 = scmp.eq.s32.totalorder %s28, 0
    %p63 = por %p61, %p62
    %p64 = scmp.ne.s32.totalorder %s50, %s51
    %p65 = scmp.eq.s32.totalorder %s29, 1
    %p66 = por %p64, %p65
    %p68 = scmp.ne.s32.totalorder %s51, %s67
    %p69 = scmp.eq.s32.totalorder %s29, 0
    %p70 = por %p68, %p69
    %s71 = ssub.s32 %s30, %s42
    %s72 = ssub.s32 %s31, %s38
    %s73 = sor.u32 %s71, %s72
    %p74 = scmp.eq.s32.totalorder %s73, 0
    %s76 = sadd.s32 %s75, 1
    %s77 = scalar_select %p74, %s75, %s76
    %p80 = pneg %p74
    %p81 = scmp.eq.s32.totalorder %s23, 1
    %p82 = por %p80, %p81
    %p83 = scmp.ne.s32.totalorder %s75, %s78
    %p84 = scmp.eq.s32.totalorder %s23, 0
    %p85 = por %p83, %p84
    %p86 = scmp.ne.s32.totalorder %s75, %s78
    %p87 = scmp.eq.s32.totalorder %s28, 1
    %p88 = por %p86, %p87
    %p89 = scmp.ne.s32.totalorder %s78, %s79
    %p90 = scmp.eq.s32.totalorder %s28, 0
    %p91 = por %p89, %p90
    %p92 = scmp.ne.s32.totalorder %s78, %s79
    %p93 = scmp.eq.s32.totalorder %s29, 1
    %p94 = por %p92, %p93
    %p96 = scmp.ne.s32.totalorder %s79, %s95
    %p97 = scmp.eq.s32.totalorder %s29, 0
    %p98 = por %p96, %p97
    %s99 = ssub.s32 %s30, %s42
    %s100 = ssub.s32 %s31, %s38
    %s101 = sor.u32 %s99, %s100
    %p102 = scmp.eq.s32.totalorder %s101, 0
    %s104 = sadd.s32 %s103, 1
    %s105 = scalar_select %p102, %s103, %s104
    %p108 = pneg %p102
    %p109 = scmp.eq.s32.totalorder %s23, 1
    %p110 = por %p108, %p109
    %p111 = scmp.ne.s32.totalorder %s103, %s106
    %p112 = scmp.eq.s32.totalorder %s23, 0
    %p113 = por %p111, %p112
    %p114 = scmp.ne.s32.totalorder %s103, %s106
    %p115 = scmp.eq.s32.totalorder %s28, 1
    %p116 = por %p114, %p115
    %p117 = scmp.ne.s32.totalorder %s106, %s107
    %p118 = scmp.eq.s32.totalorder %s28, 0
    %p119 = por %p117, %p118
    %p120 = scmp.ne.s32.totalorder %s106, %s107
    %p121 = scmp.eq.s32.totalorder %s29, 1
    %p122 = por %p120, %p121
    %p124 = scmp.ne.s32.totalorder %s107, %s123
    %p125 = scmp.eq.s32.totalorder %s29, 0
    %p126 = por %p124, %p125
    %s127 = ssub.s32 %s30, %s42
    %s128 = ssub.s32 %s31, %s38
    %s129 = sor.u32 %s127, %s128
    %p130 = scmp.eq.s32.totalorder %s129, 0
    %s132 = sadd.s32 %s131, 1
    %s133 = scalar_select %p130, %s131, %s132
    %p136 = pneg %p130
    %p137 = scmp.eq.s32.totalorder %s23, 1
    %p138 = por %p136, %p137
    %p139 = scmp.ne.s32.totalorder %s131, %s134
    %p140 = scmp.eq.s32.totalorder %s23, 0
    %p141 = por %p139, %p140
    %p142 = scmp.ne.s32.totalorder %s131, %s134
    %p143 = scmp.eq.s32.totalorder %s28, 1
    %p144 = por %p142, %p143
    %p145 = scmp.ne.s32.totalorder %s134, %s135
    %p146 = scmp.eq.s32.totalorder %s28, 0
    %p147 = por %p145, %p146
    %p148 = scmp.ne.s32.totalorder %s134, %s135
    %p149 = scmp.eq.s32.totalorder %s29, 1
    %p150 = por %p148, %p149
    %p152 = scmp.ne.s32.totalorder %s135, %s151
    %p153 = scmp.eq.s32.totalorder %s29, 0
    %p154 = por %p152, %p153
    %s156 = sadd.s32 %s155, 1
    %p159 = scmp.eq.s32.totalorder %s23, 1
    %p160 = scmp.ne.s32.totalorder %s155, %s157
    %p161 = scmp.eq.s32.totalorder %s23, 0
    %p162 = por %p160, %p161
    %p163 = scmp.ne.s32.totalorder %s155, %s157
    %p164 = scmp.eq.s32.totalorder %s28, 1
    %p165 = por %p163, %p164
    %p166 = scmp.ne.s32.totalorder %s157, %s158
    %p167 = scmp.eq.s32.totalorder %s28, 0
    %p168 = por %p166, %p167
    %p169 = scmp.ne.s32.totalorder %s157, %s158
    %p170 = scmp.eq.s32.totalorder %s29, 1
    %p171 = por %p169, %p170
    %p173 = scmp.ne.s32.totalorder %s158, %s172
    %p174 = scmp.eq.s32.totalorder %s29, 0
    %p175 = por %p173, %p174
    %s177 = sadd.s32 %s176, 1
    %p180 = scmp.eq.s32.totalorder %s23, 1
    %p181 = scmp.ne.s32.totalorder %s176, %s178
    %p182 = scmp.eq.s32.totalorder %s23, 0
    %p183 = por %p181, %p182
    %p184 = scmp.ne.s32.totalorder %s176, %s178
    %p185 = scmp.eq.s32.totalorder %s28, 1
    %p186 = por %p184, %p185
    %p187 = scmp.ne.s32.totalorder %s178, %s179
    %p188 = scmp.eq.s32.totalorder %s28, 0
    %p189 = por %p187, %p188
    %p190 = scmp.ne.s32.totalorder %s178, %s179
    %p191 = scmp.eq.s32.totalorder %s29, 1
    %p192 = por %p190, %p191
    %p194 = scmp.ne.s32.totalorder %s179, %s193
    %p195 = scmp.eq.s32.totalorder %s29, 0
    %p196 = por %p194, %p195
    %s198 = sadd.s32 %s197, 1
    %p201 = scmp.eq.s32.totalorder %s23, 1
    %p202 = scmp.ne.s32.totalorder %s197, %s199
    %p203 = scmp.eq.s32.totalorder %s23, 0
    %p204 = por %p202, %p203
    %p205 = scmp.ne.s32.totalorder %s197, %s199
    %p206 = scmp.eq.s32.totalorder %s28, 1
    %p207 = por %p205, %p206
    %p208 = scmp.ne.s32.totalorder %s199, %s200
    %p209 = scmp.eq.s32.totalorder %s28, 0
    %p210 = por %p208, %p209
    %p211 = scmp.ne.s32.totalorder %s199, %s200
    %p212 = scmp.eq.s32.totalorder %s29, 1
    %p213 = por %p211, %p212
    %p215 = scmp.ne.s32.totalorder %s200, %s214
    %p216 = scmp.eq.s32.totalorder %s29, 0
    %p217 = por %p215, %p216
    %s219 = sadd.s32 %s218, 1
    %p222 = scmp.eq.s32.totalorder %s23, 1
    %p223 = scmp.ne.s32.totalorder %s218, %s220
    %p224 = scmp.eq.s32.totalorder %s23, 0
    %p225 = por %p223, %p224
    %p226 = scmp.ne.s32.totalorder %s218, %s220
    %p227 = scmp.eq.s32.totalorder %s28, 1
    %p228 = por %p226, %p227
    %p229 = scmp.ne.s32.totalorder %s220, %s221
    %p230 = scmp.eq.s32.totalorder %s28, 0
    %p231 = por %p229, %p230
    %p232 = scmp.ne.s32.totalorder %s220, %s221
    %p233 = scmp.eq.s32.totalorder %s29, 1
    %p234 = por %p232, %p233
    %p236 = scmp.ne.s32.totalorder %s221, %s235
    %p237 = scmp.eq.s32.totalorder %s29, 0
    %p238 = por %p236, %p237
    %s240 = sadd.s32 %s239, 1
    %p243 = scmp.eq.s32.totalorder %s23, 1
    %p244 = scmp.ne.s32.totalorder %s239, %s241
    %p245 = scmp.eq.s32.totalorder %s23, 0
    %p246 = por %p244, %p245
    %p247 = scmp.ne.s32.totalorder %s239, %s241
    %p248 = scmp.eq.s32.totalorder %s28, 1
    %p249 = por %p247, %p248
    %p250 = scmp.ne.s32.totalorder %s241, %s242
    %p251 = scmp.eq.s32.totalorder %s28, 0
    %p252 = por %p250, %p251
    %p253 = scmp.ne.s32.totalorder %s241, %s242
    %p254 = scmp.eq.s32.totalorder %s29, 1
    %p255 = por %p253, %p254
    %p257 = scmp.ne.s32.totalorder %s242, %s256
    %p258 = scmp.eq.s32.totalorder %s29, 0
    %p259 = por %p257, %p258
    %s261 = sadd.s32 %s260, 1
    %p264 = scmp.eq.s32.totalorder %s23, 1
    %p265 = scmp.ne.s32.totalorder %s260, %s262
    %p266 = scmp.eq.s32.totalorder %s23, 0
    %p267 = por %p265, %p266
    %p268 = scmp.ne.s32.totalorder %s260, %s262
    %p269 = scmp.eq.s32.totalorder %s28, 1
    %p270 = por %p268, %p269
    %p271 = scmp.ne.s32.totalorder %s262, %s263
    %p272 = scmp.eq.s32.totalorder %s28, 0
    %p273 = por %p271, %p272
    %p274 = scmp.ne.s32.totalorder %s262, %s263
    %p275 = scmp.eq.s32.totalorder %s29, 1
    %p276 = por %p274, %p275
    %p278 = scmp.ne.s32.totalorder %s263, %s277
    %p279 = scmp.eq.s32.totalorder %s29, 0
    %p280 = por %p278, %p279
    %s281 = ssub.s32 %s30, %s42
    %s282 = ssub.s32 %s31, %s38
    %s283 = sor.u32 %s281, %s282
    %p284 = scmp.eq.s32.totalorder %s283, 0
    %s286 = sadd.s32 %s285, 1
    %s287 = scalar_select %p284, %s285, %s286
    %p290 = pneg %p284
    %p291 = scmp.eq.s32.totalorder %s23, 1
    %p292 = por %p290, %p291
    %p293 = scmp.ne.s32.totalorder %s285, %s288
    %p294 = scmp.eq.s32.totalorder %s23, 0
    %p295 = por %p293, %p294
    %p296 = scmp.ne.s32.totalorder %s285, %s288
    %p297 = scmp.eq.s32.totalorder %s28, 1
    %p298 = por %p296, %p297
    %p299 = scmp.ne.s32.totalorder %s288, %s289
    %p300 = scmp.eq.s32.totalorder %s28, 0
    %p301 = por %p299, %p300
    %p302 = scmp.ne.s32.totalorder %s288, %s289
    %p303 = scmp.eq.s32.totalorder %s29, 1
    %p304 = por %p302, %p303
    %p306 = scmp.ne.s32.totalorder %s289, %s305
    %p307 = scmp.eq.s32.totalorder %s29, 0
    %p308 = por %p306, %p307
    %p309 = scmp.le.s32.totalorder 1, %s23
    %p310 = scmp.lt.s32.totalorder %s23, 3
    %p311 = pnand %p309, %p310
    %p312 = pneg %p311
    // Predicated region
    $region9: #{consistency_forward.1} parent=5 // pred_check
      _
    $region10: #{consistency_forward.1} parent=5 // pred_check_branch
      %314 = sbr.rel (%p311) target = $region12
    $region11: #{consistency_forward.1} parent=5 // pred_region
      %s315 = ssub.s32 %s23, 1
      // Predicated region
      $region13: #{consistency_forward.1} parent=11 // pred_check
        %p316 = pneg %p168
      $region14: #{consistency_forward.1} parent=11 // pred_check_branch
        %318 = sbr.rel (%p316) target = $region16
      $region15: #{consistency_forward.1} parent=11 // pred_region
        _
      $region16: #{consistency_forward.1} parent=11 // pred_fallthru
        _
      // Predicated region
      $region17: #{consistency_forward.1} parent=11 // pred_check
        %p319 = pneg %p189
      $region18: #{consistency_forward.1} parent=11 // pred_check_branch
        %321 = sbr.rel (%p319) target = $region20
      $region19: #{consistency_forward.1} parent=11 // pred_region
        _
      $region20: #{consistency_forward.1} parent=11 // pred_fallthru
        _
      // Predicated region
      $region21: #{consistency_forward.1} parent=11 // pred_check
        %p322 = pneg %p210
      $region22: #{consistency_forward.1} parent=11 // pred_check_branch
        %324 = sbr.rel (%p322) target = $region24
      $region23: #{consistency_forward.1} parent=11 // pred_region
        _
      $region24: #{consistency_forward.1} parent=11 // pred_fallthru
        _
      // Predicated region
      $region25: #{consistency_forward.1} parent=11 // pred_check
        %p325 = pneg %p231
      $region26: #{consistency_forward.1} parent=11 // pred_check_branch
        %327 = sbr.rel (%p325) target = $region28
      $region27: #{consistency_forward.1} parent=11 // pred_region
        _
      $region28: #{consistency_forward.1} parent=11 // pred_fallthru
        _
      // Predicated region
      $region29: #{consistency_forward.1} parent=11 // pred_check
        %p328 = pneg %p252
      $region30: #{consistency_forward.1} parent=11 // pred_check_branch
        %330 = sbr.rel (%p328) target = $region32
      $region31: #{consistency_forward.1} parent=11 // pred_region
        _
      $region32: #{consistency_forward.1} parent=11 // pred_fallthru
        _
      // Predicated region
      $region33: #{consistency_forward.1} parent=11 // pred_check
        %p331 = pneg %p273
      $region34: #{consistency_forward.1} parent=11 // pred_check_branch
        %333 = sbr.rel (%p331) target = $region36
      $region35: #{consistency_forward.1} parent=11 // pred_region
        _
      $region36: #{consistency_forward.1} parent=11 // pred_fallthru
        _
    $region12: #{consistency_forward.1} parent=5 // pred_fallthru
      _
    %p334 = scmp.lt.s32.totalorder %s23, 2
    // Predicated region
    $region37: #{consistency_forward.1} parent=5 // pred_check
      %p335 = pneg %p334
    $region38: #{consistency_forward.1} parent=5 // pred_check_branch
      %337 = sbr.rel (%p335) target = $region40
    $region39: #{consistency_forward.1} parent=5 // pred_region
      // Predicated region
      $region41: #{consistency_forward.1} parent=39 // pred_check
        %p338 = pneg %p57
      $region42: #{consistency_forward.1} parent=39 // pred_check_branch
        %340 = sbr.rel (%p338) target = $region44
      $region43: #{consistency_forward.1} parent=39 // pred_region
        %p341 = scmp.lt.s32.totalorder %s30, 1
        %s342 = scalar_select %p341, %s30, 1
        %p343 = scmp.lt.s32.totalorder %s31, 0
        %s344 = scalar_select %p343, %s31, 0
        %s345 = smul.addr %s342, 4
        %s346 = sadd.s32 %s344, %s345
        %s347 = smul.addr %s346, 8
        %s348 = scalar_lea.vmem %s1, %s347
      $region44: #{consistency_forward.1} parent=39 // pred_fallthru
        _
      // Predicated region
      $region45: #{consistency_forward.1} parent=39 // pred_check
        %p349 = pneg %p85
      $region46: #{consistency_forward.1} parent=39 // pred_check_branch
        %351 = sbr.rel (%p349) target = $region48
      $region47: #{consistency_forward.1} parent=39 // pred_region
        %p352 = scmp.lt.s32.totalorder %s30, 1
        %s353 = scalar_select %p352, %s30, 1
        %p354 = scmp.lt.s32.totalorder %s31, 0
        %s355 = scalar_select %p354, %s31, 0
        %s356 = smul.addr %s353, 4
        %s357 = sadd.s32 %s355, %s356
        %s358 = smul.addr %s357, 8
        %s359 = scalar_lea.vmem %s2, %s358
      $region48: #{consistency_forward.1} parent=39 // pred_fallthru
        _
      // Predicated region
      $region49: #{consistency_forward.1} parent=39 // pred_check
        %p360 = pneg %p113
      $region50: #{consistency_forward.1} parent=39 // pred_check_branch
        %362 = sbr.rel (%p360) target = $region52
      $region51: #{consistency_forward.1} parent=39 // pred_region
        %p363 = scmp.lt.s32.totalorder %s30, 1
        %s364 = scalar_select %p363, %s30, 1
        %p365 = scmp.lt.s32.totalorder %s31, 0
        %s366 = scalar_select %p365, %s31, 0
        %s367 = smul.addr %s364, 4
        %s368 = sadd.s32 %s366, %s367
        %s369 = smul.addr %s368, 8
        %s370 = scalar_lea.vmem %s3, %s369
      $region52: #{consistency_forward.1} parent=39 // pred_fallthru
        _
      // Predicated region
      $region53: #{consistency_forward.1} parent=39 // pred_check
        %p371 = pneg %p141
      $region54: #{consistency_forward.1} parent=39 // pred_check_branch
        %373 = sbr.rel (%p371) target = $region56
      $region55: #{consistency_forward.1} parent=39 // pred_region
        %p374 = scmp.lt.s32.totalorder %s30, 1
        %s375 = scalar_select %p374, %s30, 1
        %p376 = scmp.lt.s32.totalorder %s31, 0
        %s377 = scalar_select %p376, %s31, 0
        %s378 = sadd.s32 %s377, %s375
        %s379 = scalar_lea.vmem %s4, %s378
      $region56: #{consistency_forward.1} parent=39 // pred_fallthru
        _
    $region40: #{consistency_forward.1} parent=5 // pred_fallthru
      _
    %p380 = scmp.le.s32.totalorder 1, %s23
    %p381 = scmp.lt.s32.totalorder %s23, 3
    %p382 = pnand %p380, %p381
    %p383 = pneg %p382
    // Predicated region
    $region57: #{consistency_forward.1} parent=5 // pred_check
      _
    $region58: #{consistency_forward.1} parent=5 // pred_check_branch
      %385 = sbr.rel (%p382) target = $region60
    $region59: #{consistency_forward.1} parent=5 // pred_region
      %s386 = ssub.s32 %s23, 1
      %p387 = scmp.lt.s32.totalorder %s32, 1
      %s388 = scalar_select %p387, %s32, 1
      %p389 = scmp.lt.s32.totalorder %s33, 0
      %s390 = scalar_select %p389, %s33, 0
      %s391 = smul.addr %s388, 4
      %s392 = sadd.s32 %s390, %s391
      %s393 = smul.addr %s392, 8
      %s394 = scalar_lea.vmem %s1, %s393
      %p395 = pneg %p63
      %p396 = pneg %p60
      %p397 = scmp.lt.s32.totalorder %s32, 1
      %s398 = scalar_select %p397, %s32, 1
      %p399 = scmp.lt.s32.totalorder %s33, 0
      %s400 = scalar_select %p399, %s33, 0
      %s401 = smul.addr %s398, 4
      %s402 = sadd.s32 %s400, %s401
      %s403 = smul.addr %s402, 8
      %s404 = scalar_lea.vmem %s2, %s403
      %p405 = pneg %p91
      %p406 = pneg %p88
      %p407 = scmp.lt.s32.totalorder %s32, 1
      %s408 = scalar_select %p407, %s32, 1
      %p409 = scmp.lt.s32.totalorder %s33, 0
      %s410 = scalar_select %p409, %s33, 0
      %s411 = smul.addr %s408, 4
      %s412 = sadd.s32 %s410, %s411
      %s413 = smul.addr %s412, 8
      %s414 = scalar_lea.vmem %s3, %s413
      %p415 = pneg %p119
      %p416 = pneg %p116
      %p417 = scmp.lt.s32.totalorder %s32, 1
      %s418 = scalar_select %p417, %s32, 1
      %p419 = scmp.lt.s32.totalorder %s33, 0
      %s420 = scalar_select %p419, %s33, 0
      %s421 = sadd.s32 %s420, %s418
      %s422 = scalar_lea.vmem %s4, %s421
      %p423 = pneg %p147
      %p424 = pneg %p144
      %p425 = pneg %p168
      %p426 = pneg %p165
      %p427 = pneg %p189
      %p428 = pneg %p186
      %p429 = pneg %p210
      %p430 = pneg %p207
      %p431 = pneg %p231
      %p432 = pneg %p228
      %p433 = pneg %p252
      %p434 = pneg %p249
      %p435 = pneg %p273
      %p436 = pneg %p270
      %p437 = pneg %p301
      %p438 = pneg %p298
      %p439 = scmp.lt.s32.totalorder %s32, 1
      %s440 = scalar_select %p439, %s32, 1
      %p441 = scmp.lt.s32.totalorder %s33, 0
      %s442 = scalar_select %p441, %s33, 0
      %s443 = sadd.s32 %s442, %s440
      %s444 = scalar_lea.vmem %s11, %s443
      %p445 = scmp.lt.s32.totalorder %s32, 1
      %s446 = scalar_select %p445, %s32, 1
      %p447 = scmp.lt.s32.totalorder %s33, 0
      %s448 = scalar_select %p447, %s33, 0
      %s449 = smul.addr %s446, 4
      %s450 = sadd.s32 %s448, %s449
      %s451 = smul.addr %s450, 8
      %s452 = scalar_lea.vmem %s1, %s451
      %p453 = scmp.lt.s32.totalorder %s32, 1
      %s454 = scalar_select %p453, %s32, 1
      %p455 = scmp.lt.s32.totalorder %s33, 0
      %s456 = scalar_select %p455, %s33, 0
      %s457 = smul.addr %s454, 4
      %s458 = sadd.s32 %s456, %s457
      %s459 = smul.addr %s458, 8
      %s460 = scalar_lea.vmem %s2, %s459
      %p461 = scmp.lt.s32.totalorder %s32, 1
      %s462 = scalar_select %p461, %s32, 1
      %p463 = scmp.lt.s32.totalorder %s33, 0
      %s464 = scalar_select %p463, %s33, 0
      %s465 = smul.addr %s462, 4
      %s466 = sadd.s32 %s464, %s465
      %s467 = smul.addr %s466, 8
      %s468 = scalar_lea.vmem %s3, %s467
      %p469 = scmp.lt.s32.totalorder %s32, 1
      %s470 = scalar_select %p469, %s32, 1
      %p471 = scmp.lt.s32.totalorder %s33, 0
      %s472 = scalar_select %p471, %s33, 0
      %s473 = sadd.s32 %s472, %s470
      %s474 = scalar_lea.vmem %s4, %s473
      %p475 = scmp.lt.s32.totalorder %s32, 1
      %s476 = scalar_select %p475, %s32, 1
      %p477 = scmp.lt.s32.totalorder %s33, 0
      %s478 = scalar_select %p477, %s33, 0
      %s479 = sadd.s32 %s478, %s476
      %s480 = scalar_lea.vmem %s11, %s479
      %s482 = smul.u32 %s32, 128
      %s483 = sld [smem:[#allocation3 + %s482]]
      %s484 = sadd.s32 %s482, 1
      %s485 = sld [smem:[#allocation3 + %s484]]
      %s486 = sadd.s32 %s482, 2
      %s487 = sld [smem:[#allocation3 + %s486]]
      %s488 = sadd.s32 %s482, 3
      %s489 = sld [smem:[#allocation3 + %s488]]
      %s490 = sadd.s32 %s482, 4
      %s491 = sld [smem:[#allocation3 + %s490]]
      %s492 = sadd.s32 %s482, 5
      %s493 = sld [smem:[#allocation3 + %s492]]
      %v494 = vld [vmem:[%s452] sm:$0xff]
      %v495 = vld [vmem:[%s452 + $0x8] sm:$0xff]
      %v496 = vld [vmem:[%s452 + $0x10] sm:$0xff]
      %v497 = vld [vmem:[%s452 + $0x18] sm:$0xff]
      %v498 = vld [vmem:[%s460] sm:$0xff]
      %v499 = vld [vmem:[%s460 + $0x8] sm:$0xff]
      %v500 = vld [vmem:[%s460 + $0x10] sm:$0xff]
      %v501 = vld [vmem:[%s460 + $0x18] sm:$0xff]
      %v502 = vld [vmem:[%s474] sm:$0x1]
      %v503 = vld [vmem:[%s468] sm:$0xff]
      %v504 = vld [vmem:[%s468 + $0x8] sm:$0xff]
      %v505 = vld [vmem:[%s468 + $0x10] sm:$0xff]
      %v506 = vld [vmem:[%s468 + $0x18] sm:$0xff]
      %v507 = vadd.f32 %v503, %v498
      %v508 = vadd.f32 %v504, %v499
      %v509 = vadd.f32 %v505, %v500
      %v510 = vadd.f32 %v506, %v501
      %v511 = vstv %s483
      %v512 = vmul.f32 %v507, %v511
      %v513 = vmul.f32 %v508, %v511
      %v514 = vmul.f32 %v509, %v511
      %v515 = vmul.f32 %v510, %v511
      %v516 = vadd.f32 %v494, %v512
      %v517 = vadd.f32 %v495, %v513
      %v518 = vadd.f32 %v496, %v514
      %v519 = vadd.f32 %v497, %v515
      %v520 = vstv %s485
      %v521 = vmul.f32 %v520, %v516
      %v522 = vmul.f32 %v520, %v517
      %v523 = vmul.f32 %v520, %v518
      %v524 = vmul.f32 %v520, %v519
      %v525 = vpack.c.bf16 %v522, %v521
      %v526 = vpack.c.bf16 %v524, %v523
      %v527 = vpack.c.bf16 %v499, %v498
      %v528 = vpack.c.bf16 %v501, %v500
      %v529 = vld [vmem:[%s5] sm:$0xf]
      %v530 = vld [vmem:[%s5 + $0x4] sm:$0xf]
      %v531 = vld [vmem:[%s5 + $0x8] sm:$0xf]
      %v532 = vld [vmem:[%s5 + $0xc] sm:$0xf]
      %v533 = vld [vmem:[%s5 + $0x10] sm:$0xf]
      %v534 = vld [vmem:[%s5 + $0x14] sm:$0xf]
      %v535 = vld [vmem:[%s5 + $0x18] sm:$0xf]
      %v536 = vld [vmem:[%s5 + $0x1c] sm:$0xf]
      %v537 = vld [vmem:[%s5 + $0x20] sm:$0xf]
      %v538 = vld [vmem:[%s5 + $0x24] sm:$0xf]
      %v539 = vld [vmem:[%s5 + $0x28] sm:$0xf]
      %v540 = vld [vmem:[%s5 + $0x2c] sm:$0xf]
      %v541 = vld [vmem:[%s5 + $0x30] sm:$0xf]
      %v542 = vld [vmem:[%s5 + $0x34] sm:$0xf]
      %v543 = vld [vmem:[%s5 + $0x38] sm:$0xf]
      %v544 = vld [vmem:[%s5 + $0x3c] sm:$0xf]
      %v545 = vld [vmem:[%s6] sm:$0xf]
      %v546 = vld [vmem:[%s6 + $0x4] sm:$0xf]
      %v547 = vld [vmem:[%s6 + $0x8] sm:$0xf]
      %v548 = vld [vmem:[%s6 + $0xc] sm:$0xf]
      %v549 = vld [vmem:[%s6 + $0x10] sm:$0xf]
      %v550 = vld [vmem:[%s6 + $0x14] sm:$0xf]
      %v551 = vld [vmem:[%s6 + $0x18] sm:$0xf]
      %v552 = vld [vmem:[%s6 + $0x1c] sm:$0xf]
      %v553 = vld [vmem:[%s6 + $0x20] sm:$0xf]
      %v554 = vld [vmem:[%s6 + $0x24] sm:$0xf]
      %v555 = vld [vmem:[%s6 + $0x28] sm:$0xf]
      %v556 = vld [vmem:[%s6 + $0x2c] sm:$0xf]
      %v557 = vld [vmem:[%s6 + $0x30] sm:$0xf]
      %v558 = vld [vmem:[%s6 + $0x34] sm:$0xf]
      %v559 = vld [vmem:[%s6 + $0x38] sm:$0xf]
      %v560 = vld [vmem:[%s6 + $0x3c] sm:$0xf]
      %v577 = vunpack.c.l.b16 %v545
      %v578 = vunpack.c.l.b16 %v546
      %v579 = vunpack.c.l.b16 %v547
      %v580 = vunpack.c.l.b16 %v548
      %v581 = vunpack.c.l.b16 %v549
      %v582 = vunpack.c.l.b16 %v550
      %v583 = vunpack.c.l.b16 %v551
      %v584 = vunpack.c.l.b16 %v552
      %v585 = vunpack.c.l.b16 %v553
      %v586 = vunpack.c.l.b16 %v554
      %v587 = vunpack.c.l.b16 %v555
      %v588 = vunpack.c.l.b16 %v556
      %v589 = vunpack.c.l.b16 %v557
      %v590 = vunpack.c.l.b16 %v558
      %v591 = vunpack.c.l.b16 %v559
      %v592 = vunpack.c.l.b16 %v560
      %v593 = vpack.c.b16 %v578, %v577
      %v594 = vpack.c.b16 %v580, %v579
      %v595 = vpack.c.b16 %v582, %v581
      %v596 = vpack.c.b16 %v584, %v583
      %v597 = vpack.c.b16 %v586, %v585
      %v598 = vpack.c.b16 %v588, %v587
      %v599 = vpack.c.b16 %v590, %v589
      %v600 = vpack.c.b16 %v592, %v591
      %vm601 = vcmask 261120
      %v603 = vsel %vm601, %v593, 0
      %v606 = vsel %vm601, %v594, 0
      %v609 = vsel %vm601, %v595, 0
      %v612 = vsel %vm601, %v596, 0
      %v615 = vsel %vm601, %v597, 0
      %v618 = vsel %vm601, %v598, 0
      %v621 = vsel %vm601, %v599, 0
      %v624 = vsel %vm601, %v600, 0
      %626 = vmatprep.subr.bf16.mxu0 0
      %627 = vmatpush1.bf16.msra.mxu0 %v527
      %628 = vmatprep.subr.bf16.mxu0 0
      %629 = vmatpush1.bf16.msra.mxu0 %v528
      %630 = vmatprep.subr.bf16.mxu0 0
      %631 = vmatpush1.bf16.msra.mxu0 0
      %632 = vmatprep.subr.bf16.mxu0 0
      %633 = vmatpush1.bf16.msra.mxu0 0
      %634 = vmatprep.subr.bf16.mxu0 0
      %635 = vmatpush1.bf16.msra.mxu0 0
      %636 = vmatprep.subr.bf16.mxu0 0
      %637 = vmatpush1.bf16.msra.mxu0 0
      %638 = vmatprep.subr.bf16.mxu0 0
      %639 = vmatpush1.bf16.msra.mxu0 0
      %640 = vmatprep.subr.bf16.mxu0 0
      %641 = vmatpush1.bf16.msra.mxu0 0
      %642 = vmatprep.subr.bf16.mxu0 0
      %643 = vmatpush1.bf16.msra.mxu0 0
      %644 = vmatprep.subr.bf16.mxu0 0
      %645 = vmatpush1.bf16.msra.mxu0 0
      %646 = vmatprep.subr.bf16.mxu0 0
      %647 = vmatpush1.bf16.msra.mxu0 0
      %648 = vmatprep.subr.bf16.mxu0 0
      %649 = vmatpush1.bf16.msra.mxu0 0
      %650 = vmatprep.subr.bf16.mxu0 0
      %651 = vmatpush1.bf16.msra.mxu0 0
      %652 = vmatprep.subr.bf16.mxu0 0
      %653 = vmatpush1.bf16.msra.mxu0 0
      %654 = vmatprep.subr.bf16.mxu0 0
      %655 = vmatpush1.bf16.msra.mxu0 0
      %656 = vmatprep.subr.bf16.mxu0 0
      %657 = vmatpush1.bf16.msra.mxu0 0
      %658 = vmatprep.mubr.bf16.mxu0 0
      %659 = vmatmul.mubr.bf16.gmra.mrb[0].mxu0 %v603
      %v660 = vpop.f32.mrb[0].mxu0
      %v661 = vadd.f32 0.0, %v660
      %v662 = vpop.f32.mrb[0].mxu0
      %v663 = vpop.f32.mrb[0].mxu0
      %v664 = vadd.f32 0.0, %v663
      %v665 = vpop.f32.mrb[0].mxu0
      %666 = vmatprep.mubr.bf16.mxu0 0
      %667 = vmatmul.mubr.bf16.gmra.mrb[0].mxu0 %v606
      %v668 = vpop.f32.mrb[0].mxu0
      %v669 = vadd.f32 0.0, %v668
      %v670 = vpop.f32.mrb[0].mxu0
      %v671 = vpop.f32.mrb[0].mxu0
      %v672 = vadd.f32 0.0, %v671
      %v673 = vpop.f32.mrb[0].mxu0
      %674 = vmatprep.mubr.bf16.mxu0 0
      %675 = vmatmul.mubr.bf16.gmra.mrb[0].mxu0 %v609
      %v676 = vpop.f32.mrb[0].mxu0
      %v677 = vadd.f32 0.0, %v676
      %v678 = vpop.f32.mrb[0].mxu0
      %v679 = vpop.f32.mrb[0].mxu0
      %v680 = vadd.f32 0.0, %v679
      %v681 = vpop.f32.mrb[0].mxu0
      %682 = vmatprep.mubr.bf16.mxu0 0
      %683 = vmatmul.mubr.bf16.gmra.mrb[0].mxu0 %v612
      %v684 = vpop.f32.mrb[0].mxu0
      %v685 = vadd.f32 0.0, %v684
      %v686 = vpop.f32.mrb[0].mxu0
      %v687 = vpop.f32.mrb[0].mxu0
      %v688 = vadd.f32 0.0, %v687
      %v689 = vpop.f32.mrb[0].mxu0
      %690 = vmatprep.mubr.bf16.mxu0 0
      %691 = vmatmul.mubr.bf16.gmra.mrb[0].mxu0 %v615
      %v692 = vpop.f32.mrb[0].mxu0
      %v693 = vadd.f32 0.0, %v692
      %v694 = vpop.f32.mrb[0].mxu0
      %v695 = vpop.f32.mrb[0].mxu0
      %v696 = vadd.f32 0.0, %v695
      %v697 = vpop.f32.mrb[0].mxu0
      %698 = vmatprep.mubr.bf16.mxu0 0
      %699 = vmatmul.mubr.bf16.gmra.mrb[0].mxu0 %v618
      %v700 = vpop.f32.mrb[0].mxu0
      %v701 = vadd.f32 0.0, %v700
      %v702 = vpop.f32.mrb[0].mxu0
      %v703 = vpop.f32.mrb[0].mxu0
      %v704 = vadd.f32 0.0, %v703
      %v705 = vpop.f32.mrb[0].mxu0
      %706 = vmatprep.mubr.bf16.mxu0 0
      %707 = vmatmul.mubr.bf16.gmra.mrb[0].mxu0 %v621
      %v708 = vpop.f32.mrb[0].mxu0
      %v709 = vadd.f32 0.0, %v708
      %v710 = vpop.f32.mrb[0].mxu0
      %v711 = vpop.f32.mrb[0].mxu0
      %v712 = vadd.f32 0.0, %v711
      %v713 = vpop.f32.mrb[0].mxu0
      %714 = vmatprep.mubr.bf16.mxu0 0
      %715 = vmatmul.mubr.bf16.gmra.mrb[0].mxu0 %v624
      %v716 = vpop.f32.mrb[0].mxu0
      %v717 = vadd.f32 0.0, %v716
      %v718 = vpop.f32.mrb[0].mxu0
      %v719 = vpop.f32.mrb[0].mxu0
      %v720 = vadd.f32 0.0, %v719
      %v721 = vpop.f32.mrb[0].mxu0
      %722 = vdwg.mxu0
      %v739 = vunpack.c.l.b16 %v529
      %v740 = vunpack.c.l.b16 %v530
      %v741 = vunpack.c.l.b16 %v531
      %v742 = vunpack.c.l.b16 %v532
      %v743 = vunpack.c.l.b16 %v533
      %v744 = vunpack.c.l.b16 %v534
      %v745 = vunpack.c.l.b16 %v535
      %v746 = vunpack.c.l.b16 %v536
      %v747 = vunpack.c.l.b16 %v537
      %v748 = vunpack.c.l.b16 %v538
      %v749 = vunpack.c.l.b16 %v539
      %v750 = vunpack.c.l.b16 %v540
      %v751 = vunpack.c.l.b16 %v541
      %v752 = vunpack.c.l.b16 %v542
      %v753 = vunpack.c.l.b16 %v543
      %v754 = vunpack.c.l.b16 %v544
      %v755 = vpack.c.b16 %v740, %v739
      %v756 = vpack.c.b16 %v742, %v741
      %v757 = vpack.c.b16 %v744, %v743
      %v758 = vpack.c.b16 %v746, %v745
      %v759 = vpack.c.b16 %v748, %v747
      %v760 = vpack.c.b16 %v750, %v749
      %v761 = vpack.c.b16 %v752, %v751
      %v762 = vpack.c.b16 %v754, %v753
      %v764 = vsel %vm601, %v755, 0
      %v767 = vsel %vm601, %v756, 0
      %v770 = vsel %vm601, %v757, 0
      %v773 = vsel %vm601, %v758, 0
      %v776 = vsel %vm601, %v759, 0
      %v779 = vsel %vm601, %v760, 0
      %v782 = vsel %vm601, %v761, 0
      %v785 = vsel %vm601, %v762, 0
      %787 = vmatprep.subr.bf16.mxu0 0
      %788 = vmatpush1.bf16.msra.mxu0 %v525
      %789 = vmatprep.subr.bf16.mxu0 0
      %790 = vmatpush1.bf16.msra.mxu0 %v526
      %791 = vmatprep.subr.bf16.mxu0 0
      %792 = vmatpush1.bf16.msra.mxu0 0
      %793 = vmatprep.subr.bf16.mxu0 0
      %794 = vmatpush1.bf16.msra.mxu0 0
      %795 = vmatprep.subr.bf16.mxu0 0
      %796 = vmatpush1.bf16.msra.mxu0 0
      %797 = vmatprep.subr.bf16.mxu0 0
      %798 = vmatpush1.bf16.msra.mxu0 0
      %799 = vmatprep.subr.bf16.mxu0 0
      %800 = vmatpush1.bf16.msra.mxu0 0
      %801 = vmatprep.subr.bf16.mxu0 0
      %802 = vmatpush1.bf16.msra.mxu0 0
      %803 = vmatprep.subr.bf16.mxu0 0
      %804 = vmatpush1.bf16.msra.mxu0 0
      %805 = vmatprep.subr.bf16.mxu0 0
      %806 = vmatpush1.bf16.msra.mxu0 0
      %807 = vmatprep.subr.bf16.mxu0 0
      %808 = vmatpush1.bf16.msra.mxu0 0
      %809 = vmatprep.subr.bf16.mxu0 0
      %810 = vmatpush1.bf16.msra.mxu0 0
      %811 = vmatprep.subr.bf16.mxu0 0
      %812 = vmatpush1.bf16.msra.mxu0 0
      %813 = vmatprep.subr.bf16.mxu0 0
      %814 = vmatpush1.bf16.msra.mxu0 0
      %815 = vmatprep.subr.bf16.mxu0 0
      %816 = vmatpush1.bf16.msra.mxu0 0
      %817 = vmatprep.subr.bf16.mxu0 0
      %818 = vmatpush1.bf16.msra.mxu0 0
      %819 = vmatprep.mubr.bf16.mxu0 0
      %820 = vmatmul.mubr.bf16.gmra.mrb[0].mxu0 %v764
      %v821 = vpop.f32.mrb[0].mxu0
      %v822 = vadd.f32 %v661, %v821
      %v823 = vpop.f32.mrb[0].mxu0
      %v824 = vpop.f32.mrb[0].mxu0
      %v825 = vadd.f32 %v664, %v824
      %v826 = vpop.f32.mrb[0].mxu0
      %827 = vmatprep.mubr.bf16.mxu0 0
      %828 = vmatmul.mubr.bf16.gmra.mrb[0].mxu0 %v767
      %v829 = vpop.f32.mrb[0].mxu0
      %v830 = vadd.f32 %v669, %v829
      %v831 = vpop.f32.mrb[0].mxu0
      %v832 = vpop.f32.mrb[0].mxu0
      %v833 = vadd.f32 %v672, %v832
      %v834 = vpop.f32.mrb[0].mxu0
      %835 = vmatprep.mubr.bf16.mxu0 0
      %836 = vmatmul.mubr.bf16.gmra.mrb[0].mxu0 %v770
      %v837 = vpop.f32.mrb[0].mxu0
      %v838 = vadd.f32 %v677, %v837
      %v839 = vpop.f32.mrb[0].mxu0
      %v840 = vpop.f32.mrb[0].mxu0
      %v841 = vadd.f32 %v680, %v840
      %v842 = vpop.f32.mrb[0].mxu0
      %843 = vmatprep.mubr.bf16.mxu0 0
      %844 = vmatmul.mubr.bf16.gmra.mrb[0].mxu0 %v773
      %v845 = vpop.f32.mrb[0].mxu0
      %v846 = vadd.f32 %v685, %v845
      %v847 = vpop.f32.mrb[0].mxu0
      %v848 = vpop.f32.mrb[0].mxu0
      %v849 = vadd.f32 %v688, %v848
      %v850 = vpop.f32.mrb[0].mxu0
      %851 = vmatprep.mubr.bf16.mxu0 0
      %852 = vmatmul.mubr.bf16.gmra.mrb[0].mxu0 %v776
      %v853 = vpop.f32.mrb[0].mxu0
      %v854 = vadd.f32 %v693, %v853
      %v855 = vpop.f32.mrb[0].mxu0
      %v856 = vpop.f32.mrb[0].mxu0
      %v857 = vadd.f32 %v696, %v856
      %v858 = vpop.f32.mrb[0].mxu0
      %859 = vmatprep.mubr.bf16.mxu0 0
      %860 = vmatmul.mubr.bf16.gmra.mrb[0].mxu0 %v779
      %v861 = vpop.f32.mrb[0].mxu0
      %v862 = vadd.f32 %v701, %v861
      %v863 = vpop.f32.mrb[0].mxu0
      %v864 = vpop.f32.mrb[0].mxu0
      %v865 = vadd.f32 %v704, %v864
      %v866 = vpop.f32.mrb[0].mxu0
      %867 = vmatprep.mubr.bf16.mxu0 0
      %868 = vmatmul.mubr.bf16.gmra.mrb[0].mxu0 %v782
      %v869 = vpop.f32.mrb[0].mxu0
      %v870 = vadd.f32 %v709, %v869
      %v871 = vpop.f32.mrb[0].mxu0
      %v872 = vpop.f32.mrb[0].mxu0
      %v873 = vadd.f32 %v712, %v872
      %v874 = vpop.f32.mrb[0].mxu0
      %875 = vmatprep.mubr.bf16.mxu0 0
      %876 = vmatmul.mubr.bf16.gmra.mrb[0].mxu0 %v785
      %v877 = vpop.f32.mrb[0].mxu0
      %v878 = vadd.f32 %v717, %v877
      %v879 = vpop.f32.mrb[0].mxu0
      %v880 = vpop.f32.mrb[0].mxu0
      %v881 = vadd.f32 %v720, %v880
      %v882 = vpop.f32.mrb[0].mxu0
      %883 = vdwg.mxu0
      %v884 = vld [vmem:[%s8] sm:$0xff]
      %v885 = vld [vmem:[%s8 + $0x8] sm:$0xff]
      %v886 = vld [vmem:[%s8 + $0x10] sm:$0xff]
      %v887 = vld [vmem:[%s8 + $0x18] sm:$0xff]
      %v888 = vld [vmem:[%s8 + $0x20] sm:$0xff]
      %v889 = vld [vmem:[%s8 + $0x28] sm:$0xff]
      %v890 = vld [vmem:[%s8 + $0x30] sm:$0xff]
      %v891 = vld [vmem:[%s8 + $0x38] sm:$0xff]
      %v892 = vld [vmem:[%s8 + $0x40] sm:$0xff]
      %v893 = vld [vmem:[%s8 + $0x48] sm:$0xff]
      %v894 = vld [vmem:[%s8 + $0x50] sm:$0xff]
      %v895 = vld [vmem:[%s8 + $0x58] sm:$0xff]
      %v896 = vld [vmem:[%s8 + $0x60] sm:$0xff]
      %v897 = vld [vmem:[%s8 + $0x68] sm:$0xff]
      %v898 = vld [vmem:[%s8 + $0x70] sm:$0xff]
      %v899 = vld [vmem:[%s8 + $0x78] sm:$0xff]
      %v900 = vstv %s491
      %v901 = vmul.f32 %v900, %v884
      %v902 = vmul.f32 %v900, %v885
      %v903 = vmul.f32 %v900, %v886
      %v904 = vmul.f32 %v900, %v887
      %v905 = vmul.f32 %v900, %v888
      %v906 = vmul.f32 %v900, %v889
      %v907 = vmul.f32 %v900, %v890
      %v908 = vmul.f32 %v900, %v891
      %v909 = vmul.f32 %v900, %v892
      %v910 = vmul.f32 %v900, %v893
      %v911 = vmul.f32 %v900, %v894
      %v912 = vmul.f32 %v900, %v895
      %v913 = vmul.f32 %v900, %v896
      %v914 = vmul.f32 %v900, %v897
      %v915 = vmul.f32 %v900, %v898
      %v916 = vmul.f32 %v900, %v899
      %918 = vset.pattern.permute.xlu0 0
      %919 = vperm.xlu0 %918, %v901
      %v920 = vpop.permute.xlu0 %919
      %923 = vset.pattern.permute.xlu0 0
      %924 = vperm.xlu0 %923, %v902
      %v925 = vpop.permute.xlu0 %924
      %928 = vset.pattern.permute.xlu0 0
      %929 = vperm.xlu0 %928, %v903
      %v930 = vpop.permute.xlu0 %929
      %933 = vset.pattern.permute.xlu0 0
      %934 = vperm.xlu0 %933, %v904
      %v935 = vpop.permute.xlu0 %934
      %938 = vset.pattern.permute.xlu0 0
      %939 = vperm.xlu0 %938, %v905
      %v940 = vpop.permute.xlu0 %939
      %943 = vset.pattern.permute.xlu0 0
      %944 = vperm.xlu0 %943, %v906
      %v945 = vpop.permute.xlu0 %944
      %948 = vset.pattern.permute.xlu0 0
      %949 = vperm.xlu0 %948, %v907
      %v950 = vpop.permute.xlu0 %949
      %953 = vset.pattern.permute.xlu0 0
      %954 = vperm.xlu0 %953, %v908
      %v955 = vpop.permute.xlu0 %954
      %958 = vset.pattern.permute.xlu0 0
      %959 = vperm.xlu0 %958, %v909
      %v960 = vpop.permute.xlu0 %959
      %963 = vset.pattern.permute.xlu0 0
      %964 = vperm.xlu0 %963, %v910
      %v965 = vpop.permute.xlu0 %964
      %968 = vset.pattern.permute.xlu0 0
      %969 = vperm.xlu0 %968, %v911
      %v970 = vpop.permute.xlu0 %969
      %973 = vset.pattern.permute.xlu0 0
      %974 = vperm.xlu0 %973, %v912
      %v975 = vpop.permute.xlu0 %974
      %978 = vset.pattern.permute.xlu0 0
      %979 = vperm.xlu0 %978, %v913
      %v980 = vpop.permute.xlu0 %979
      %983 = vset.pattern.permute.xlu0 0
      %984 = vperm.xlu0 %983, %v914
      %v985 = vpop.permute.xlu0 %984
      %988 = vset.pattern.permute.xlu0 0
      %989 = vperm.xlu0 %988, %v915
      %v990 = vpop.permute.xlu0 %989
      %993 = vset.pattern.permute.xlu0 0
      %994 = vperm.xlu0 %993, %v916
      %v995 = vpop.permute.xlu0 %994
      %v997 = vadd.f32 %v822, %v920
      %v998 = vadd.f32 %v825, %v925
      %v999 = vadd.f32 %v830, %v930
      %v1000 = vadd.f32 %v833, %v935
      %v1001 = vadd.f32 %v838, %v940
      %v1002 = vadd.f32 %v841, %v945
      %v1003 = vadd.f32 %v846, %v950
      %v1004 = vadd.f32 %v849, %v955
      %v1005 = vadd.f32 %v854, %v960
      %v1006 = vadd.f32 %v857, %v965
      %v1007 = vadd.f32 %v862, %v970
      %v1008 = vadd.f32 %v865, %v975
      %v1009 = vadd.f32 %v870, %v980
      %v1010 = vadd.f32 %v873, %v985
      %v1011 = vadd.f32 %v878, %v990
      %v1012 = vadd.f32 %v881, %v995
      %v1013 = vld [vmem:[%s7] sm:$0xff]
      %v1014 = vld [vmem:[%s7 + $0x8] sm:$0xff]
      %v1015 = vld [vmem:[%s7 + $0x10] sm:$0xff]
      %v1016 = vld [vmem:[%s7 + $0x18] sm:$0xff]
      %v1017 = vld [vmem:[%s7 + $0x20] sm:$0xff]
      %v1018 = vld [vmem:[%s7 + $0x28] sm:$0xff]
      %v1019 = vld [vmem:[%s7 + $0x30] sm:$0xff]
      %v1020 = vld [vmem:[%s7 + $0x38] sm:$0xff]
      %v1021 = vld [vmem:[%s7 + $0x40] sm:$0xff]
      %v1022 = vld [vmem:[%s7 + $0x48] sm:$0xff]
      %v1023 = vld [vmem:[%s7 + $0x50] sm:$0xff]
      %v1024 = vld [vmem:[%s7 + $0x58] sm:$0xff]
      %v1025 = vld [vmem:[%s7 + $0x60] sm:$0xff]
      %v1026 = vld [vmem:[%s7 + $0x68] sm:$0xff]
      %v1027 = vld [vmem:[%s7 + $0x70] sm:$0xff]
      %v1028 = vld [vmem:[%s7 + $0x78] sm:$0xff]
      %1030 = vset.pattern.permute.xlu0 0
      %1031 = vperm.xlu0 %1030, %v1013
      %v1032 = vpop.permute.xlu0 %1031
      %1035 = vset.pattern.permute.xlu0 0
      %1036 = vperm.xlu0 %1035, %v1014
      %v1037 = vpop.permute.xlu0 %1036
      %1040 = vset.pattern.permute.xlu0 0
      %1041 = vperm.xlu0 %1040, %v1015
      %v1042 = vpop.permute.xlu0 %1041
      %1045 = vset.pattern.permute.xlu0 0
      %1046 = vperm.xlu0 %1045, %v1016
      %v1047 = vpop.permute.xlu0 %1046
      %1050 = vset.pattern.permute.xlu0 0
      %1051 = vperm.xlu0 %1050, %v1017
      %v1052 = vpop.permute.xlu0 %1051
      %1055 = vset.pattern.permute.xlu0 0
      %1056 = vperm.xlu0 %1055, %v1018
      %v1057 = vpop.permute.xlu0 %1056
      %1060 = vset.pattern.permute.xlu0 0
      %1061 = vperm.xlu0 %1060, %v1019
      %v1062 = vpop.permute.xlu0 %1061
      %1065 = vset.pattern.permute.xlu0 0
      %1066 = vperm.xlu0 %1065, %v1020
      %v1067 = vpop.permute.xlu0 %1066
      %1070 = vset.pattern.permute.xlu0 0
      %1071 = vperm.xlu0 %1070, %v1021
      %v1072 = vpop.permute.xlu0 %1071
      %1075 = vset.pattern.permute.xlu0 0
      %1076 = vperm.xlu0 %1075, %v1022
      %v1077 = vpop.permute.xlu0 %1076
      %1080 = vset.pattern.permute.xlu0 0
      %1081 = vperm.xlu0 %1080, %v1023
      %v1082 = vpop.permute.xlu0 %1081
      %1085 = vset.pattern.permute.xlu0 0
      %1086 = vperm.xlu0 %1085, %v1024
      %v1087 = vpop.permute.xlu0 %1086
      %1090 = vset.pattern.permute.xlu0 0
      %1091 = vperm.xlu0 %1090, %v1025
      %v1092 = vpop.permute.xlu0 %1091
      %1095 = vset.pattern.permute.xlu0 0
      %1096 = vperm.xlu0 %1095, %v1026
      %v1097 = vpop.permute.xlu0 %1096
      %1100 = vset.pattern.permute.xlu0 0
      %1101 = vperm.xlu0 %1100, %v1027
      %v1102 = vpop.permute.xlu0 %1101
      %1105 = vset.pattern.permute.xlu0 0
      %1106 = vperm.xlu0 %1105, %v1028
      %v1107 = vpop.permute.xlu0 %1106
      %v1109 = vadd.f32 %v997, %v1032
      %v1110 = vadd.f32 %v998, %v1037
      %v1111 = vadd.f32 %v999, %v1042
      %v1112 = vadd.f32 %v1000, %v1047
      %v1113 = vadd.f32 %v1001, %v1052
      %v1114 = vadd.f32 %v1002, %v1057
      %v1115 = vadd.f32 %v1003, %v1062
      %v1116 = vadd.f32 %v1004, %v1067
      %v1117 = vadd.f32 %v1005, %v1072
      %v1118 = vadd.f32 %v1006, %v1077
      %v1119 = vadd.f32 %v1007, %v1082
      %v1120 = vadd.f32 %v1008, %v1087
      %v1121 = vadd.f32 %v1009, %v1092
      %v1122 = vadd.f32 %v1010, %v1097
      %v1123 = vadd.f32 %v1011, %v1102
      %v1124 = vadd.f32 %v1012, %v1107
      %v1125 = vtanh.pop %v1109
      %v1126 = vtanh.pop %v1110
      %v1127 = vtanh.pop %v1111
      %v1128 = vtanh.pop %v1112
      %v1129 = vtanh.pop %v1113
      %v1130 = vtanh.pop %v1114
      %v1131 = vtanh.pop %v1115
      %v1132 = vtanh.pop %v1116
      %v1133 = vtanh.pop %v1117
      %v1134 = vtanh.pop %v1118
      %v1135 = vtanh.pop %v1119
      %v1136 = vtanh.pop %v1120
      %v1137 = vtanh.pop %v1121
      %v1138 = vtanh.pop %v1122
      %v1139 = vtanh.pop %v1123
      %v1140 = vtanh.pop %v1124
      %v1141 = vld [vmem:[%s9] sm:$0xf]
      %v1142 = vld [vmem:[%s9 + $0x4] sm:$0xf]
      %v1143 = vld [vmem:[%s9 + $0x8] sm:$0xf]
      %v1144 = vld [vmem:[%s9 + $0xc] sm:$0xf]
      %v1145 = vpack.c.bf16 %v1126, %v1125
      %v1146 = vpack.c.bf16 %v1128, %v1127
      %v1147 = vpack.c.bf16 %v1130, %v1129
      %v1148 = vpack.c.bf16 %v1132, %v1131
      %v1149 = vpack.c.bf16 %v1134, %v1133
      %v1150 = vpack.c.bf16 %v1136, %v1135
      %v1151 = vpack.c.bf16 %v1138, %v1137
      %v1152 = vpack.c.bf16 %v1140, %v1139
      %v1153 = vld [vmem:[%s10] sm:$0xff]
      %v1154 = vld [vmem:[%s10 + $0x8] sm:$0xff]
      %v1155 = vld [vmem:[%s10 + $0x10] sm:$0xff]
      %v1156 = vld [vmem:[%s10 + $0x18] sm:$0xff]
      %1158 = vset.pattern.permute.xlu0 0
      %1159 = vperm.xlu0 %1158, %v1153
      %v1160 = vpop.permute.xlu0 %1159
      %1163 = vset.pattern.permute.xlu0 0
      %1164 = vperm.xlu0 %1163, %v1154
      %v1165 = vpop.permute.xlu0 %1164
      %1168 = vset.pattern.permute.xlu0 0
      %1169 = vperm.xlu0 %1168, %v1155
      %v1170 = vpop.permute.xlu0 %1169
      %1173 = vset.pattern.permute.xlu0 0
      %1174 = vperm.xlu0 %1173, %v1156
      %v1175 = vpop.permute.xlu0 %1174
      %v1181 = vunpack.c.l.b16 %v1141
      %v1182 = vunpack.c.l.b16 %v1142
      %v1183 = vunpack.c.l.b16 %v1143
      %v1184 = vunpack.c.l.b16 %v1144
      %v1185 = vpack.c.b16 %v1182, %v1181
      %v1186 = vpack.c.b16 %v1184, %v1183
      %1189 = vmatprep.subr.bf16.mxu0 0
      %1190 = vmatpush1.bf16.msra.mxu0 %v1145
      %1191 = vmatprep.subr.bf16.mxu0 0
      %1192 = vmatpush1.bf16.msra.mxu0 %v1146
      %1193 = vmatprep.subr.bf16.mxu0 0
      %1194 = vmatpush1.bf16.msra.mxu0 %v1147
      %1195 = vmatprep.subr.bf16.mxu0 0
      %1196 = vmatpush1.bf16.msra.mxu0 %v1148
      %1197 = vmatprep.subr.bf16.mxu0 0
      %1198 = vmatpush1.bf16.msra.mxu0 %v1149
      %1199 = vmatprep.subr.bf16.mxu0 0
      %1200 = vmatpush1.bf16.msra.mxu0 %v1150
      %1201 = vmatprep.subr.bf16.mxu0 0
      %1202 = vmatpush1.bf16.msra.mxu0 %v1151
      %1203 = vmatprep.subr.bf16.mxu0 0
      %1204 = vmatpush1.bf16.msra.mxu0 %v1152
      %1205 = vmatprep.subr.bf16.mxu0 0
      %1206 = vmatpush1.bf16.msra.mxu0 0
      %1207 = vmatprep.subr.bf16.mxu0 0
      %1208 = vmatpush1.bf16.msra.mxu0 0
      %1209 = vmatprep.subr.bf16.mxu0 0
      %1210 = vmatpush1.bf16.msra.mxu0 0
      %1211 = vmatprep.subr.bf16.mxu0 0
      %1212 = vmatpush1.bf16.msra.mxu0 0
      %1213 = vmatprep.subr.bf16.mxu0 0
      %1214 = vmatpush1.bf16.msra.mxu0 0
      %1215 = vmatprep.subr.bf16.mxu0 0
      %1216 = vmatpush1.bf16.msra.mxu0 0
      %1217 = vmatprep.subr.bf16.mxu0 0
      %1218 = vmatpush1.bf16.msra.mxu0 0
      %1219 = vmatprep.subr.bf16.mxu0 0
      %1220 = vmatpush1.bf16.msra.mxu0 0
      %1221 = vmatprep.mubr.bf16.mxu0 0
      %1222 = vmatmul.mubr.bf16.gmra.mrb[0].mxu0 %v1185
      %v1223 = vpop.f32.mrb[0].mxu0
      %v1224 = vadd.f32 %v1160, %v1223
      %v1225 = vpop.f32.mrb[0].mxu0
      %v1226 = vpop.f32.mrb[0].mxu0
      %v1227 = vadd.f32 %v1165, %v1226
      %v1228 = vpop.f32.mrb[0].mxu0
      %1229 = vmatprep.mubr.bf16.mxu0 0
      %1230 = vmatmul.mubr.bf16.gmra.mrb[0].mxu0 %v1186
      %v1231 = vpop.f32.mrb[0].mxu0
      %v1232 = vadd.f32 %v1170, %v1231
      %v1233 = vpop.f32.mrb[0].mxu0
      %v1234 = vpop.f32.mrb[0].mxu0
      %v1235 = vadd.f32 %v1175, %v1234
      %v1236 = vpop.f32.mrb[0].mxu0
      %1237 = vdwg.mxu0
      %v1238 = vstv %s487
      %v1239 = vmul.f32 %v1238, %v516
      %v1240 = vmul.f32 %v1238, %v517
      %v1241 = vmul.f32 %v1238, %v518
      %v1242 = vmul.f32 %v1238, %v519
      %v1243 = vstv %s489
      %v1244 = vmul.f32 %v1243, %v1224
      %v1245 = vmul.f32 %v1243, %v1227
      %v1246 = vmul.f32 %v1243, %v1232
      %v1247 = vmul.f32 %v1243, %v1235
      %v1248 = vadd.f32 %v1239, %v1244
      %v1249 = vadd.f32 %v1240, %v1245
      %v1250 = vadd.f32 %v1241, %v1246
      %v1251 = vadd.f32 %v1242, %v1247
      %v1252 = vsub.f32 %v1248, %v494
      %v1253 = vsub.f32 %v1249, %v495
      %v1254 = vsub.f32 %v1250, %v496
      %v1255 = vsub.f32 %v1251, %v497
      %v1256 = vstv %s493
      %v1257 = vmul.f32 %v1256, %v502
      %v1258 = vmul.f32 %v1252, %v1252
      %v1259 = vmul.f32 %v1253, %v1253
      %v1260 = vmul.f32 %v1254, %v1254
      %v1261 = vmul.f32 %v1255, %v1255
      %v1263 = vlaneseq
      %v1264 = vshrl.u32 %v1263, 7
      %v1265 = vsub.s32 0, %v1264
      %v1266 = vrot.slane %v1257, %v1265
      %v1268 = vmul.f32 %v1266, %v1258
      %v1269 = vmul.f32 %v1266, %v1259
      %v1270 = vmul.f32 %v1266, %v1260
      %v1271 = vmul.f32 %v1266, %v1261
      %vm1272 = vcmask 130048
      %v1273 = vsel %vm1272, %v1268, 0.0
      %v1274 = vsel %vm1272, %v1269, 0.0
      %v1275 = vadd.f32 %v1273, %v1274
      %v1276 = vsel %vm1272, %v1270, 0.0
      %v1277 = vadd.f32 %v1275, %v1276
      %v1278 = vsel %vm1272, %v1271, 0.0
      %v1279 = vadd.f32 %v1277, %v1278
      %v1280 = vrot.slane %v1279, 4
      %v1281 = vadd.f32 %v1279, %v1280
      %v1282 = vrot.slane %v1281, 2
      %v1283 = vadd.f32 %v1281, %v1282
      %v1284 = vrot.slane %v1283, 1
      %v1285 = vadd.f32 %v1283, %v1284
      %vm1286 = vcmask 122880
      %1287 = vst.msk [vmem:[%s480] sm:$0x1] %vm1286, %v1285
      %p1288 = scmp.lt.s32.totalorder %s32, 1
      %s1289 = scalar_select %p1288, %s32, 1
      %p1290 = scmp.lt.s32.totalorder %s33, 0
      %s1291 = scalar_select %p1290, %s33, 0
      %s1292 = sadd.s32 %s1291, %s1289
      %s1293 = scalar_lea.vmem %s11, %s1292
      // Predicated region
      $region61: #{consistency_forward.1} parent=59 // pred_check
        %p1294 = pneg %p298
      $region62: #{consistency_forward.1} parent=59 // pred_check_branch
        %1296 = sbr.rel (%p1294) target = $region64
      $region63: #{consistency_forward.1} parent=59 // pred_region
        _
      $region64: #{consistency_forward.1} parent=59 // pred_fallthru
        _
    $region60: #{consistency_forward.1} parent=5 // pred_fallthru
      _
    %p1297 = scmp.le.s32.totalorder 2, %s23
    // Predicated region
    $region65: #{consistency_forward.1} parent=5 // pred_check
      %p1298 = pneg %p1297
    $region66: #{consistency_forward.1} parent=5 // pred_check_branch
      %1300 = sbr.rel (%p1298) target = $region68
    $region67: #{consistency_forward.1} parent=5 // pred_region
      %s1301 = ssub.s32 %s23, 2
      // Predicated region
      $region69: #{consistency_forward.1} parent=67 // pred_check
        %p1302 = pneg %p304
      $region70: #{consistency_forward.1} parent=67 // pred_check_branch
        %1304 = sbr.rel (%p1302) target = $region72
      $region71: #{consistency_forward.1} parent=67 // pred_region
        %p1305 = scmp.lt.s32.totalorder %s34, 1
        %s1306 = scalar_select %p1305, %s34, 1
        %p1307 = scmp.lt.s32.totalorder %s35, 0
        %s1308 = scalar_select %p1307, %s35, 0
        %s1309 = sadd.s32 %s1308, %s1306
        %s1310 = scalar_lea.vmem %s11, %s1309
      $region72: #{consistency_forward.1} parent=67 // pred_fallthru
        _
    $region68: #{consistency_forward.1} parent=5 // pred_fallthru
      _
  $region6: #{consistency_forward.1} parent=0 // loop_footer
    %s27 = sadd.s32 1, %s23
  $region7: #{consistency_forward.1} parent=0 // loop_footer_branch
    %22 = sbr.rel target = $region3
  $region8: #{consistency_forward.1} parent=0 // loop_exit
    _

</llo_original>
